<compile_context>
chip_gen: v6e
topology: v6e:2x2x1
jax: 0.10.0
libtpu: 0.0.40
codegen_flags: <defaults>
</compile_context>

<pallas_src>
import functools

import jax
import jax.numpy as jnp
from jax.experimental import pallas as pl
from jax.experimental.pallas import tpu as pltpu


def dqn_kernel(x_ref,
               w1_ref, b1_ref,
               w2_ref, b2_ref,
               w3_ref, b3_ref,
               w4_ref, b4_ref,
               o_ref):
    """Fused 4-layer MLP forward for one batch tile; params are VMEM-resident."""
    x = x_ref[...]
    # f32 accumulation on the MXU regardless of I/O dtype.
    h = jnp.dot(x, w1_ref[...], preferred_element_type=jnp.float32) + b1_ref[...]
    h = jnp.maximum(h, 0.0)
    h = jnp.dot(h, w2_ref[...], preferred_element_type=jnp.float32) + b2_ref[...]
    h = jnp.maximum(h, 0.0)
    h = jnp.dot(h, w3_ref[...], preferred_element_type=jnp.float32) + b3_ref[...]
    h = jnp.maximum(h, 0.0)
    out = jnp.dot(h, w4_ref[...], preferred_element_type=jnp.float32) + b4_ref[...]
    # Note: the 4 bias adds are cheap VPU broadcast-adds; folding them into the
    # matmuls would need in-kernel concats (lane-crossing copies) that cost more
    # than they save at widths 64/32/8/A.
    o_ref[...] = out.astype(o_ref.dtype)


_MAX_BATCH_TILE = 8192  # rows; a few MiB of VMEM at these layer widths.


def _round_up(n, m):
    return ((n + m - 1) // m) * m


def _cores_per_chip():
    """TensorCores a 'parallel' grid axis can be sharded across (v7x has 2)."""
    try:
        kind = jax.devices()[0].device_kind.lower()
    except Exception:
        return 1
    return 2 if "v7" in kind else 1


def _choose_batch_tile(B):
    per_core = pl.cdiv(B, _cores_per_chip())
    if per_core <= _MAX_BATCH_TILE:
        # One tile per TensorCore: avoids per-grid-step overhead on single-TC
        # chips, engages both TCs on v7x; round up to the f32 sublane (8 rows).
        return _round_up(per_core, 8)
    # Huge batches: cap the tile for VMEM headroom; 8192 is a multiple of both
    # the 128-row (v5e) and 256-row (v6e/v7x) MXU pass granularities.
    return _MAX_BATCH_TILE


@functools.partial(jax.jit,
                   static_argnames=("batch_tile", "io_dtype", "pad_out_lanes"))
def dqn_forward(x, params, batch_tile=None, io_dtype=None, pad_out_lanes=False):
    """Runs the fused DQN MLP as a Pallas kernel.

    x:      [B, state_size]
    params: dict with w1..w4 ([in, out]) and b1..b4 ([1, out])
    io_dtype: optionally cast x / output at the pallas_call boundary
        (e.g. jnp.bfloat16 halves HBM traffic for training batches);
        accumulation stays f32.
    pad_out_lanes: pad the action dim to 128 lanes so output stores are
        unmasked vst (trades 32x output DMA bytes; only worth it if a profile
        shows the kernel store-bound at very large B).
    """
    B, S = x.shape
    A = params["w4"].shape[1]
    if batch_tile is None:
        batch_tile = _choose_batch_tile(B)

    if io_dtype is not None:
        x = x.astype(io_dtype)
    out_dtype = x.dtype

    w4, b4 = params["w4"], params["b4"]
    A_out = A
    if pad_out_lanes and A % 128 != 0:
        A_out = _round_up(A, 128)
        w4 = jnp.pad(w4, ((0, 0), (0, A_out - A)))
        b4 = jnp.pad(b4, ((0, 0), (0, A_out - A)))

    # Parameters are tiny (~11 KB total): keep each as a single whole-array
    # VMEM resident (one DMA per call, no per-step pipelining / double buffer).
    vmem_spec = pl.BlockSpec(memory_space=pltpu.MemorySpace.VMEM)

    grid = (pl.cdiv(B, batch_tile),)

    out = pl.pallas_call(
        dqn_kernel,
        out_shape=jax.ShapeDtypeStruct((B, A_out), out_dtype),
        grid_spec=pltpu.PrefetchScalarGridSpec(
            num_scalar_prefetch=0,
            grid=grid,
            in_specs=[
                pl.BlockSpec((batch_tile, S), lambda i: (i, 0)),  # x tile
                vmem_spec, vmem_spec,   # w1, b1
                vmem_spec, vmem_spec,   # w2, b2
                vmem_spec, vmem_spec,   # w3, b3
                vmem_spec, vmem_spec,   # w4, b4
            ],
            out_specs=pl.BlockSpec((batch_tile, A_out), lambda i: (i, 0)),
        ),
        compiler_params=pltpu.CompilerParams(
            dimension_semantics=("parallel",),
        ),
    )(x,
      params["w1"], params["b1"],
      params["w2"], params["b2"],
      params["w3"], params["b3"],
      w4, b4)

    if A_out != A:
        out = out[:, :A]
    return out


def dqn_reference(x, params):
    """Pure-JAX reference matching the PyTorch forward."""
    h = jnp.maximum(x @ params["w1"] + params["b1"], 0.0)
    h = jnp.maximum(h @ params["w2"] + params["b2"], 0.0)
    h = jnp.maximum(h @ params["w3"] + params["b3"], 0.0)
    return h @ params["w4"] + params["b4"]


def dqn_apply(x, params, min_pallas_batch=64, **kwargs):
    """Dispatcher: for tiny inference batches plain XLA fuses this 4-layer MLP
    with no custom-call overhead and wins; use the Pallas kernel for
    replay-buffer-sized batches."""
    if x.shape[0] < min_pallas_batch:
        return dqn_reference(x, params)
    return dqn_forward(x, params, **kwargs)


def init_dqn_params(key, state_size, action_size):
    """Deterministic init mimicking PyTorch's default Linear init
    (uniform(-1/sqrt(fan_in), 1/sqrt(fan_in)))."""
    dims = [state_size, 64, 32, 8, action_size]
    params = {}
    for idx in range(4):
        fan_in, fan_out = dims[idx], dims[idx + 1]
        key, kw, kb = jax.random.split(key, 3)
        bound = 1.0 / jnp.sqrt(float(fan_in))
        # Stored as [in, out] (transposed vs. PyTorch's [out, in]) so the
        # kernel can do x @ W directly.
        params[f"w{idx + 1}"] = jax.random.uniform(
            kw, (fan_in, fan_out), jnp.float32, minval=-bound, maxval=bound)
        params[f"b{idx + 1}"] = jax.random.uniform(
            kb, (1, fan_out), jnp.float32, minval=-bound, maxval=bound)
    return params


if __name__ == "__main__":
    state_size = 8
    action_size = 4

    key = jax.random.PRNGKey(0)
    key, kx_small, kx_big = jax.random.split(key, 3)
    params = init_dqn_params(key, state_size, action_size)

    # 1) Small inference-style batch: single sublane-aligned tile, grid=(1,).
    x_small = jax.random.normal(kx_small, (2, state_size), jnp.float32)
    out_small = jax.block_until_ready(dqn_forward(x_small, params))
    ref_small = dqn_reference(x_small, params)
    assert out_small.shape == (2, action_size)
    assert jnp.allclose(out_small, ref_small, atol=1e-4, rtol=1e-4)

    # 2) Replay-buffer-style batch: multi-tile grid + ragged last tile.
    x_big = jax.random.normal(kx_big, (300, state_size), jnp.float32)
    out_big = jax.block_until_ready(dqn_forward(x_big, params, batch_tile=128))
    ref_big = dqn_reference(x_big, params)
    assert out_big.shape == (300, action_size)
    assert jnp.allclose(out_big, ref_big, atol=1e-4, rtol=1e-4)

    # 3) Auto tile heuristic + lane-dense (128-padded) output variant.
    out_pad = jax.block_until_ready(
        dqn_forward(x_big, params, pad_out_lanes=True))
    assert jnp.allclose(out_pad, ref_big, atol=1e-4, rtol=1e-4)

    print("KERNEL_OK")
</pallas_src>

<mosaic_0001>
module attributes {stable_mosaic.version = 11 : i64} {
  func.func @dqn_kernel(%arg0: i32, %arg1: memref<8x8xf32, #tpu.memory_space<vmem>>, %arg2: memref<8x64xf32, #tpu.memory_space<vmem>>, %arg3: memref<1x64xf32, #tpu.memory_space<vmem>>, %arg4: memref<64x32xf32, #tpu.memory_space<vmem>>, %arg5: memref<1x32xf32, #tpu.memory_space<vmem>>, %arg6: memref<32x8xf32, #tpu.memory_space<vmem>>, %arg7: memref<1x8xf32, #tpu.memory_space<vmem>>, %arg8: memref<8x4xf32, #tpu.memory_space<vmem>>, %arg9: memref<1x4xf32, #tpu.memory_space<vmem>>, %arg10: memref<8x4xf32, #tpu.memory_space<vmem>>) attributes {dimension_semantics = [#tpu.dimension_semantics<parallel>], iteration_bounds = array<i64: 1>, scalar_prefetch = 0 : i64, scratch_operands = 0 : i64, tpu.core_type = #tpu.core_type<tc>, window_params = [{transform_indices = @transform_0, window_bounds = array<i64: 8, 8>}, {pipeline_mode = #tpu.pipeline_mode<synchronous>, transform_indices = @transform_1, window_bounds = array<i64: 8, 64>}, {pipeline_mode = #tpu.pipeline_mode<synchronous>, transform_indices = @transform_2, window_bounds = array<i64: 1, 64>}, {pipeline_mode = #tpu.pipeline_mode<synchronous>, transform_indices = @transform_3, window_bounds = array<i64: 64, 32>}, {pipeline_mode = #tpu.pipeline_mode<synchronous>, transform_indices = @transform_4, window_bounds = array<i64: 1, 32>}, {pipeline_mode = #tpu.pipeline_mode<synchronous>, transform_indices = @transform_5, window_bounds = array<i64: 32, 8>}, {pipeline_mode = #tpu.pipeline_mode<synchronous>, transform_indices = @transform_6, window_bounds = array<i64: 1, 8>}, {pipeline_mode = #tpu.pipeline_mode<synchronous>, transform_indices = @transform_7, window_bounds = array<i64: 8, 4>}, {pipeline_mode = #tpu.pipeline_mode<synchronous>, transform_indices = @transform_8, window_bounds = array<i64: 1, 4>}, {transform_indices = @transform_9, window_bounds = array<i64: 8, 4>}]} {
    %c0 = arith.constant 0 : index
    %c0_0 = arith.constant 0 : index
    %0 = vector.load %arg1[%c0, %c0_0] : memref<8x8xf32, #tpu.memory_space<vmem>>, vector<8x8xf32>
    %c0_1 = arith.constant 0 : index
    %c0_2 = arith.constant 0 : index
    %1 = vector.load %arg2[%c0_1, %c0_2] : memref<8x64xf32, #tpu.memory_space<vmem>>, vector<8x64xf32>
    %cst = arith.constant dense<0.000000e+00> : vector<8x64xf32>
    %2 = tpu.matmul %0, %1, %cst {dimension_numbers = #tpu.dot_dimension_numbers<[1], [0], [0], [1], [0, 0, 1, 1], [], []>} : vector<8x8xf32>, vector<8x64xf32>, vector<8x64xf32> -> vector<8x64xf32>
    %c0_3 = arith.constant 0 : index
    %c0_4 = arith.constant 0 : index
    %3 = vector.load %arg3[%c0_3, %c0_4] : memref<1x64xf32, #tpu.memory_space<vmem>>, vector<1x64xf32>
    %4 = vector.broadcast %3 : vector<1x64xf32> to vector<8x64xf32>
    %5 = arith.addf %2, %4 : vector<8x64xf32>
    %cst_5 = arith.constant 0.000000e+00 : f32
    %6 = vector.broadcast %cst_5 : f32 to vector<8x64xf32>
    %7 = arith.maximumf %5, %6 : vector<8x64xf32>
    %c0_6 = arith.constant 0 : index
    %c0_7 = arith.constant 0 : index
    %8 = vector.load %arg4[%c0_6, %c0_7] : memref<64x32xf32, #tpu.memory_space<vmem>>, vector<64x32xf32>
    %cst_8 = arith.constant dense<0.000000e+00> : vector<8x32xf32>
    %9 = tpu.matmul %7, %8, %cst_8 {dimension_numbers = #tpu.dot_dimension_numbers<[1], [0], [0], [1], [0, 0, 1, 1], [], []>} : vector<8x64xf32>, vector<64x32xf32>, vector<8x32xf32> -> vector<8x32xf32>
    %c0_9 = arith.constant 0 : index
    %c0_10 = arith.constant 0 : index
    %10 = vector.load %arg5[%c0_9, %c0_10] : memref<1x32xf32, #tpu.memory_space<vmem>>, vector<1x32xf32>
    %11 = vector.broadcast %10 : vector<1x32xf32> to vector<8x32xf32>
    %12 = arith.addf %9, %11 : vector<8x32xf32>
    %cst_11 = arith.constant 0.000000e+00 : f32
    %13 = vector.broadcast %cst_11 : f32 to vector<8x32xf32>
    %14 = arith.maximumf %12, %13 : vector<8x32xf32>
    %c0_12 = arith.constant 0 : index
    %c0_13 = arith.constant 0 : index
    %15 = vector.load %arg6[%c0_12, %c0_13] : memref<32x8xf32, #tpu.memory_space<vmem>>, vector<32x8xf32>
    %cst_14 = arith.constant dense<0.000000e+00> : vector<8x8xf32>
    %16 = tpu.matmul %14, %15, %cst_14 {dimension_numbers = #tpu.dot_dimension_numbers<[1], [0], [0], [1], [0, 0, 1, 1], [], []>} : vector<8x32xf32>, vector<32x8xf32>, vector<8x8xf32> -> vector<8x8xf32>
    %c0_15 = arith.constant 0 : index
    %c0_16 = arith.constant 0 : index
    %17 = vector.load %arg7[%c0_15, %c0_16] : memref<1x8xf32, #tpu.memory_space<vmem>>, vector<1x8xf32>
    %18 = vector.broadcast %17 : vector<1x8xf32> to vector<8x8xf32>
    %19 = arith.addf %16, %18 : vector<8x8xf32>
    %cst_17 = arith.constant 0.000000e+00 : f32
    %20 = vector.broadcast %cst_17 : f32 to vector<8x8xf32>
    %21 = arith.maximumf %19, %20 : vector<8x8xf32>
    %c0_18 = arith.constant 0 : index
    %c0_19 = arith.constant 0 : index
    %22 = vector.load %arg8[%c0_18, %c0_19] : memref<8x4xf32, #tpu.memory_space<vmem>>, vector<8x4xf32>
    %cst_20 = arith.constant dense<0.000000e+00> : vector<8x4xf32>
    %23 = tpu.matmul %21, %22, %cst_20 {dimension_numbers = #tpu.dot_dimension_numbers<[1], [0], [0], [1], [0, 0, 1, 1], [], []>} : vector<8x8xf32>, vector<8x4xf32>, vector<8x4xf32> -> vector<8x4xf32>
    %c0_21 = arith.constant 0 : index
    %c0_22 = arith.constant 0 : index
    %24 = vector.load %arg9[%c0_21, %c0_22] : memref<1x4xf32, #tpu.memory_space<vmem>>, vector<1x4xf32>
    %25 = vector.broadcast %24 : vector<1x4xf32> to vector<8x4xf32>
    %26 = arith.addf %23, %25 : vector<8x4xf32>
    %c0_23 = arith.constant 0 : index
    %c0_24 = arith.constant 0 : index
    %27 = vector.load %arg10[%c0_23, %c0_24] : memref<8x4xf32, #tpu.memory_space<vmem>>, vector<8x4xf32>
    tpu.vector_store %arg10[%c0_23, %c0_24], %26 {strides = array<i32>} : memref<8x4xf32, #tpu.memory_space<vmem>>, vector<8x4xf32>,
    return
  }
  func.func @transform_0(%arg0: i32) -> (i32, i32) {
    %c0_i32 = arith.constant 0 : i32
    %c0_i32_0 = arith.constant 0 : i32
    return %arg0, %c0_i32 : i32, i32
  }
  func.func @transform_1(%arg0: i32) -> (i32, i32) {
    %c0_i32 = arith.constant 0 : i32
    %c0_i32_0 = arith.constant 0 : i32
    %c0_i32_1 = arith.constant 0 : i32
    return %c0_i32, %c0_i32_0 : i32, i32
  }
  func.func @transform_2(%arg0: i32) -> (i32, i32) {
    %c0_i32 = arith.constant 0 : i32
    %c0_i32_0 = arith.constant 0 : i32
    %c0_i32_1 = arith.constant 0 : i32
    return %c0_i32, %c0_i32_0 : i32, i32
  }
  func.func @transform_3(%arg0: i32) -> (i32, i32) {
    %c0_i32 = arith.constant 0 : i32
    %c0_i32_0 = arith.constant 0 : i32
    %c0_i32_1 = arith.constant 0 : i32
    return %c0_i32, %c0_i32_0 : i32, i32
  }
  func.func @transform_4(%arg0: i32) -> (i32, i32) {
    %c0_i32 = arith.constant 0 : i32
    %c0_i32_0 = arith.constant 0 : i32
    %c0_i32_1 = arith.constant 0 : i32
    return %c0_i32, %c0_i32_0 : i32, i32
  }
  func.func @transform_5(%arg0: i32) -> (i32, i32) {
    %c0_i32 = arith.constant 0 : i32
    %c0_i32_0 = arith.constant 0 : i32
    %c0_i32_1 = arith.constant 0 : i32
    return %c0_i32, %c0_i32_0 : i32, i32
  }
  func.func @transform_6(%arg0: i32) -> (i32, i32) {
    %c0_i32 = arith.constant 0 : i32
    %c0_i32_0 = arith.constant 0 : i32
    %c0_i32_1 = arith.constant 0 : i32
    return %c0_i32, %c0_i32_0 : i32, i32
  }
  func.func @transform_7(%arg0: i32) -> (i32, i32) {
    %c0_i32 = arith.constant 0 : i32
    %c0_i32_0 = arith.constant 0 : i32
    %c0_i32_1 = arith.constant 0 : i32
    return %c0_i32, %c0_i32_0 : i32, i32
  }
  func.func @transform_8(%arg0: i32) -> (i32, i32) {
    %c0_i32 = arith.constant 0 : i32
    %c0_i32_0 = arith.constant 0 : i32
    %c0_i32_1 = arith.constant 0 : i32
    return %c0_i32, %c0_i32_0 : i32, i32
  }
  func.func @transform_9(%arg0: i32) -> (i32, i32) {
    %c0_i32 = arith.constant 0 : i32
    %c0_i32_0 = arith.constant 0 : i32
    return %arg0, %c0_i32 : i32, i32
  }
}

</mosaic_0001>

<llo_original>
// kernel: dqn_forward.1
$region0: #{dqn_forward.1}
  #allocation0 [shape = 'u32[]', space=smem, size = 0x4, offset = 0x4, fixed_abs, tag = 'smem constant byte address 0x4 - core index']
  #allocation1 [shape = 'u32[144,128]{1,0:T(1,128)}', space=vmem, size = 0x12000, scoped, tag = 'internal scratch']
  %s0 = inlined_call_operand.vmem [shape: f32[2,8], index: 0, kind: input, shape index: {}]
  %s1 = inlined_call_operand.vmem [shape: f32[8,64], index: 1, kind: input, shape index: {}]
  %s2 = inlined_call_operand.vmem [shape: f32[1,64], index: 2, kind: input, shape index: {}]
  %s3 = inlined_call_operand.vmem [shape: f32[64,32], index: 3, kind: input, shape index: {}]
  %s4 = inlined_call_operand.vmem [shape: f32[1,32], index: 4, kind: input, shape index: {}]
  %s5 = inlined_call_operand.vmem [shape: f32[32,8], index: 5, kind: input, shape index: {}]
  %s6 = inlined_call_operand.vmem [shape: f32[1,8], index: 6, kind: input, shape index: {}]
  %s7 = inlined_call_operand.vmem [shape: f32[8,4], index: 7, kind: input, shape index: {}]
  %s8 = inlined_call_operand.vmem [shape: f32[1,4], index: 8, kind: input, shape index: {}]
  %s9 = inlined_call_operand.hbm [shape: f32[2,4], index: 9, kind: output, shape index: {}]
  %s10 = sld [smem:[#allocation0]]
  $region46: #{dqn_forward.1} parent=0
    _
  %s12 = ssub.s32 1, %s10
  %s13 = scalar_select 0, %s12, %s10
  $region1: #{dqn_forward.1} parent=0
    #allocation2 [shape = 'u8[4096]{0}', space=vmem, size = 0x1000, scoped, tag = 'output window, operand 0, single buffered']
    #allocation3 [shape = 's32[1]{0}', space=sflag, size = 0x4, scoped, tag = 'scoped memory for dqn_forward.1']
    %14 = vsyncpa [#allocation3], 0
    // Predicated region
    $region2: #{dqn_forward.1} parent=1 // pred_check
      _
    $region3: #{dqn_forward.1} parent=1 // pred_check_branch
      %16 = sbr.rel (0) target = $region5
    $region4: #{dqn_forward.1} parent=1 // pred_region
      _
    $region5: #{dqn_forward.1} parent=1 // pred_fallthru
      _
    // Predicated region
    $region6: #{dqn_forward.1} parent=1 // pred_check
      _
    $region7: #{dqn_forward.1} parent=1 // pred_check_branch
      %18 = sbr.rel (0) target = $region9
    $region8: #{dqn_forward.1} parent=1 // pred_region
      _
    $region9: #{dqn_forward.1} parent=1 // pred_fallthru
      _
    // Predicated region
    $region10: #{dqn_forward.1} parent=1 // pred_check
      _
    $region11: #{dqn_forward.1} parent=1 // pred_check_branch
      %20 = sbr.rel (0) target = $region13
    $region12: #{dqn_forward.1} parent=1 // pred_region
      _
    $region13: #{dqn_forward.1} parent=1 // pred_fallthru
      _
    // Predicated region
    $region14: #{dqn_forward.1} parent=1 // pred_check
      _
    $region15: #{dqn_forward.1} parent=1 // pred_check_branch
      %22 = sbr.rel (0) target = $region17
    $region16: #{dqn_forward.1} parent=1 // pred_region
      _
    $region17: #{dqn_forward.1} parent=1 // pred_fallthru
      _
    // Predicated region
    $region18: #{dqn_forward.1} parent=1 // pred_check
      _
    $region19: #{dqn_forward.1} parent=1 // pred_check_branch
      %24 = sbr.rel (0) target = $region21
    $region20: #{dqn_forward.1} parent=1 // pred_region
      _
    $region21: #{dqn_forward.1} parent=1 // pred_fallthru
      _
    // Predicated region
    $region22: #{dqn_forward.1} parent=1 // pred_check
      _
    $region23: #{dqn_forward.1} parent=1 // pred_check_branch
      %26 = sbr.rel (0) target = $region25
    $region24: #{dqn_forward.1} parent=1 // pred_region
      _
    $region25: #{dqn_forward.1} parent=1 // pred_fallthru
      _
    // Predicated region
    $region26: #{dqn_forward.1} parent=1 // pred_check
      _
    $region27: #{dqn_forward.1} parent=1 // pred_check_branch
      %28 = sbr.rel (0) target = $region29
    $region28: #{dqn_forward.1} parent=1 // pred_region
      _
    $region29: #{dqn_forward.1} parent=1 // pred_fallthru
      _
    // Predicated region
    $region30: #{dqn_forward.1} parent=1 // pred_check
      _
    $region31: #{dqn_forward.1} parent=1 // pred_check_branch
      %30 = sbr.rel (0) target = $region33
    $region32: #{dqn_forward.1} parent=1 // pred_region
      _
    $region33: #{dqn_forward.1} parent=1 // pred_fallthru
      _
    // Predicated region
    $region34: #{dqn_forward.1} parent=1 // pred_check
      _
    $region35: #{dqn_forward.1} parent=1 // pred_check_branch
      %32 = sbr.rel (0) target = $region37
    $region36: #{dqn_forward.1} parent=1 // pred_region
      _
    $region37: #{dqn_forward.1} parent=1 // pred_fallthru
      _
    %v33 = vld [vmem:[%s0] sm:$0xff]
    %v34 = vld [vmem:[%s1] sm:$0xff]
    %v35 = vld [vmem:[%s2] sm:$0x1]
    %v37 = vlaneseq
    %v38 = vshrl.u32 %v37, 7
    %v39 = vsub.s32 0, %v38
    %v40 = vrot.slane %v35, %v39
    %vm42 = vcmask 64512
    %v44 = vsel %vm42, %v33, 0
    %46 = vmatprep.subr.mxu0 0.0
    %47 = vmatpush1.msra.mxu0 0.0
    %48 = vmatprep.subr.mxu0 0.0
    %49 = vmatpush1.msra.mxu0 0.0
    %50 = vmatprep.subr.mxu0 0.0
    %51 = vmatpush1.msra.mxu0 0.0
    %52 = vmatprep.subr.mxu0 0.0
    %53 = vmatpush1.msra.mxu0 0.0
    %54 = vmatprep.subr.mxu0 0.0
    %55 = vmatpush1.msra.mxu0 0.0
    %56 = vmatprep.subr.mxu0 0.0
    %57 = vmatpush1.msra.mxu0 0.0
    %58 = vmatprep.subr.mxu0 0.0
    %59 = vmatpush1.msra.mxu0 0.0
    %60 = vmatprep.subr.mxu0 0.0
    %61 = vmatpush1.msra.mxu0 0.0
    %62 = vmatprep.subr.mxu0 0.0
    %63 = vmatpush1.msra.mxu0 0.0
    %64 = vmatprep.subr.mxu0 0.0
    %65 = vmatpush1.msra.mxu0 0.0
    %66 = vmatprep.subr.mxu0 0.0
    %67 = vmatpush1.msra.mxu0 0.0
    %68 = vmatprep.subr.mxu0 0.0
    %69 = vmatpush1.msra.mxu0 0.0
    %70 = vmatprep.subr.mxu0 0.0
    %71 = vmatpush1.msra.mxu0 0.0
    %72 = vmatprep.subr.mxu0 0.0
    %73 = vmatpush1.msra.mxu0 0.0
    %74 = vmatprep.subr.mxu0 0.0
    %75 = vmatpush1.msra.mxu0 0.0
    %76 = vmatprep.subr.mxu0 0.0
    %77 = vmatpush1.msra.mxu0 %v34
    %78 = vmatprep.subr.mxu0 0.0
    %79 = vmatpush2.msra.mxu0 0.0
    %80 = vmatprep.subr.mxu0 0.0
    %81 = vmatpush2.msra.mxu0 0.0
    %82 = vmatprep.subr.mxu0 0.0
    %83 = vmatpush2.msra.mxu0 0.0
    %84 = vmatprep.subr.mxu0 0.0
    %85 = vmatpush2.msra.mxu0 0.0
    %86 = vmatprep.subr.mxu0 0.0
    %87 = vmatpush2.msra.mxu0 0.0
    %88 = vmatprep.subr.mxu0 0.0
    %89 = vmatpush2.msra.mxu0 0.0
    %90 = vmatprep.subr.mxu0 0.0
    %91 = vmatpush2.msra.mxu0 0.0
    %92 = vmatprep.subr.mxu0 0.0
    %93 = vmatpush2.msra.mxu0 0.0
    %94 = vmatprep.subr.mxu0 0.0
    %95 = vmatpush2.msra.mxu0 0.0
    %96 = vmatprep.subr.mxu0 0.0
    %97 = vmatpush2.msra.mxu0 0.0
    %98 = vmatprep.subr.mxu0 0.0
    %99 = vmatpush2.msra.mxu0 0.0
    %100 = vmatprep.subr.mxu0 0.0
    %101 = vmatpush2.msra.mxu0 0.0
    %102 = vmatprep.subr.mxu0 0.0
    %103 = vmatpush2.msra.mxu0 0.0
    %104 = vmatprep.subr.mxu0 0.0
    %105 = vmatpush2.msra.mxu0 0.0
    %106 = vmatprep.subr.mxu0 0.0
    %107 = vmatpush2.msra.mxu0 0.0
    %108 = vmatprep.subr.mxu0 0.0
    %109 = vmatpush2.msra.mxu0 0.0
    %110 = vmatprep.mubr.f32.mxu0 0.0
    %111 = vmatmul.mubr.f32.gmra.mxu0 %v44
    %v112 = vpop.f32.mrf.mxu0
    %v113 = vadd.f32 %v40, %v112
    %v114 = vpop.f32.mrf.mxu0
    %115 = vdwg.mxu0
    %v116 = vmax.f32 %v113, 0.0
    %v117 = vld [vmem:[%s3] sm:$0xff]
    %v118 = vld [vmem:[%s3 + $0x8] sm:$0xff]
    %v119 = vld [vmem:[%s3 + $0x10] sm:$0xff]
    %v120 = vld [vmem:[%s3 + $0x18] sm:$0xff]
    %v121 = vld [vmem:[%s3 + $0x20] sm:$0xff]
    %v122 = vld [vmem:[%s3 + $0x28] sm:$0xff]
    %v123 = vld [vmem:[%s3 + $0x30] sm:$0xff]
    %v124 = vld [vmem:[%s3 + $0x38] sm:$0xff]
    %v125 = vld [vmem:[%s4] sm:$0x1]
    %v127 = vlaneseq
    %v128 = vshrl.u32 %v127, 7
    %v129 = vsub.s32 0, %v128
    %v130 = vrot.slane %v125, %v129
    %vm132 = vcmask 523264
    %v134 = vsel %vm132, %v116, 0
    %136 = vmatprep.subr.mxu0 0.0
    %137 = vmatpush1.msra.mxu0 0.0
    %138 = vmatprep.subr.mxu0 0.0
    %139 = vmatpush1.msra.mxu0 0.0
    %140 = vmatprep.subr.mxu0 0.0
    %141 = vmatpush1.msra.mxu0 0.0
    %142 = vmatprep.subr.mxu0 0.0
    %143 = vmatpush1.msra.mxu0 0.0
    %144 = vmatprep.subr.mxu0 0.0
    %145 = vmatpush1.msra.mxu0 0.0
    %146 = vmatprep.subr.mxu0 0.0
    %147 = vmatpush1.msra.mxu0 0.0
    %148 = vmatprep.subr.mxu0 0.0
    %149 = vmatpush1.msra.mxu0 0.0
    %150 = vmatprep.subr.mxu0 0.0
    %151 = vmatpush1.msra.mxu0 0.0
    %152 = vmatprep.subr.mxu0 0.0
    %153 = vmatpush1.msra.mxu0 %v124
    %154 = vmatprep.subr.mxu0 0.0
    %155 = vmatpush1.msra.mxu0 %v123
    %156 = vmatprep.subr.mxu0 0.0
    %157 = vmatpush1.msra.mxu0 %v122
    %158 = vmatprep.subr.mxu0 0.0
    %159 = vmatpush1.msra.mxu0 %v121
    %160 = vmatprep.subr.mxu0 0.0
    %161 = vmatpush1.msra.mxu0 %v120
    %162 = vmatprep.subr.mxu0 0.0
    %163 = vmatpush1.msra.mxu0 %v119
    %164 = vmatprep.subr.mxu0 0.0
    %165 = vmatpush1.msra.mxu0 %v118
    %166 = vmatprep.subr.mxu0 0.0
    %167 = vmatpush1.msra.mxu0 %v117
    %168 = vmatprep.subr.mxu0 0.0
    %169 = vmatpush2.msra.mxu0 0.0
    %170 = vmatprep.subr.mxu0 0.0
    %171 = vmatpush2.msra.mxu0 0.0
    %172 = vmatprep.subr.mxu0 0.0
    %173 = vmatpush2.msra.mxu0 0.0
    %174 = vmatprep.subr.mxu0 0.0
    %175 = vmatpush2.msra.mxu0 0.0
    %176 = vmatprep.subr.mxu0 0.0
    %177 = vmatpush2.msra.mxu0 0.0
    %178 = vmatprep.subr.mxu0 0.0
    %179 = vmatpush2.msra.mxu0 0.0
    %180 = vmatprep.subr.mxu0 0.0
    %181 = vmatpush2.msra.mxu0 0.0
    %182 = vmatprep.subr.mxu0 0.0
    %183 = vmatpush2.msra.mxu0 0.0
    %184 = vmatprep.subr.mxu0 0.0
    %185 = vmatpush2.msra.mxu0 0.0
    %186 = vmatprep.subr.mxu0 0.0
    %187 = vmatpush2.msra.mxu0 0.0
    %188 = vmatprep.subr.mxu0 0.0
    %189 = vmatpush2.msra.mxu0 0.0
    %190 = vmatprep.subr.mxu0 0.0
    %191 = vmatpush2.msra.mxu0 0.0
    %192 = vmatprep.subr.mxu0 0.0
    %193 = vmatpush2.msra.mxu0 0.0
    %194 = vmatprep.subr.mxu0 0.0
    %195 = vmatpush2.msra.mxu0 0.0
    %196 = vmatprep.subr.mxu0 0.0
    %197 = vmatpush2.msra.mxu0 0.0
    %198 = vmatprep.subr.mxu0 0.0
    %199 = vmatpush2.msra.mxu0 0.0
    %200 = vmatprep.mubr.f32.mxu0 0.0
    %201 = vmatmul.mubr.f32.gmra.mxu0 %v134
    %v202 = vpop.f32.mrf.mxu0
    %v203 = vadd.f32 %v130, %v202
    %v204 = vpop.f32.mrf.mxu0
    %205 = vdwg.mxu0
    %v206 = vmax.f32 %v203, 0.0
    %v207 = vld [vmem:[%s5] sm:$0xff]
    %v208 = vld [vmem:[%s5 + $0x8] sm:$0xff]
    %v209 = vld [vmem:[%s5 + $0x10] sm:$0xff]
    %v210 = vld [vmem:[%s5 + $0x18] sm:$0xff]
    %v211 = vld [vmem:[%s6] sm:$0x1]
    %v213 = vlaneseq
    %v214 = vshrl.u32 %v213, 7
    %v215 = vsub.s32 0, %v214
    %v216 = vrot.slane %v211, %v215
    %vm218 = vcmask 261120
    %v220 = vsel %vm218, %v206, 0
    %222 = vmatprep.subr.mxu0 0.0
    %223 = vmatpush1.msra.mxu0 0.0
    %224 = vmatprep.subr.mxu0 0.0
    %225 = vmatpush1.msra.mxu0 0.0
    %226 = vmatprep.subr.mxu0 0.0
    %227 = vmatpush1.msra.mxu0 0.0
    %228 = vmatprep.subr.mxu0 0.0
    %229 = vmatpush1.msra.mxu0 0.0
    %230 = vmatprep.subr.mxu0 0.0
    %231 = vmatpush1.msra.mxu0 0.0
    %232 = vmatprep.subr.mxu0 0.0
    %233 = vmatpush1.msra.mxu0 0.0
    %234 = vmatprep.subr.mxu0 0.0
    %235 = vmatpush1.msra.mxu0 0.0
    %236 = vmatprep.subr.mxu0 0.0
    %237 = vmatpush1.msra.mxu0 0.0
    %238 = vmatprep.subr.mxu0 0.0
    %239 = vmatpush1.msra.mxu0 0.0
    %240 = vmatprep.subr.mxu0 0.0
    %241 = vmatpush1.msra.mxu0 0.0
    %242 = vmatprep.subr.mxu0 0.0
    %243 = vmatpush1.msra.mxu0 0.0
    %244 = vmatprep.subr.mxu0 0.0
    %245 = vmatpush1.msra.mxu0 0.0
    %246 = vmatprep.subr.mxu0 0.0
    %247 = vmatpush1.msra.mxu0 %v210
    %248 = vmatprep.subr.mxu0 0.0
    %249 = vmatpush1.msra.mxu0 %v209
    %250 = vmatprep.subr.mxu0 0.0
    %251 = vmatpush1.msra.mxu0 %v208
    %252 = vmatprep.subr.mxu0 0.0
    %253 = vmatpush1.msra.mxu0 %v207
    %254 = vmatprep.subr.mxu0 0.0
    %255 = vmatpush2.msra.mxu0 0.0
    %256 = vmatprep.subr.mxu0 0.0
    %257 = vmatpush2.msra.mxu0 0.0
    %258 = vmatprep.subr.mxu0 0.0
    %259 = vmatpush2.msra.mxu0 0.0
    %260 = vmatprep.subr.mxu0 0.0
    %261 = vmatpush2.msra.mxu0 0.0
    %262 = vmatprep.subr.mxu0 0.0
    %263 = vmatpush2.msra.mxu0 0.0
    %264 = vmatprep.subr.mxu0 0.0
    %265 = vmatpush2.msra.mxu0 0.0
    %266 = vmatprep.subr.mxu0 0.0
    %267 = vmatpush2.msra.mxu0 0.0
    %268 = vmatprep.subr.mxu0 0.0
    %269 = vmatpush2.msra.mxu0 0.0
    %270 = vmatprep.subr.mxu0 0.0
    %271 = vmatpush2.msra.mxu0 0.0
    %272 = vmatprep.subr.mxu0 0.0
    %273 = vmatpush2.msra.mxu0 0.0
    %274 = vmatprep.subr.mxu0 0.0
    %275 = vmatpush2.msra.mxu0 0.0
    %276 = vmatprep.subr.mxu0 0.0
    %277 = vmatpush2.msra.mxu0 0.0
    %278 = vmatprep.subr.mxu0 0.0
    %279 = vmatpush2.msra.mxu0 0.0
    %280 = vmatprep.subr.mxu0 0.0
    %281 = vmatpush2.msra.mxu0 0.0
    %282 = vmatprep.subr.mxu0 0.0
    %283 = vmatpush2.msra.mxu0 0.0
    %284 = vmatprep.subr.mxu0 0.0
    %285 = vmatpush2.msra.mxu0 0.0
    %286 = vmatprep.mubr.f32.mxu0 0.0
    %287 = vmatmul.mubr.f32.gmra.mxu0 %v220
    %v288 = vpop.f32.mrf.mxu0
    %v289 = vadd.f32 %v216, %v288
    %v290 = vpop.f32.mrf.mxu0
    %291 = vdwg.mxu0
    %v292 = vmax.f32 %v289, 0.0
    %v293 = vld [vmem:[%s7] sm:$0xff]
    %v294 = vld [vmem:[%s8] sm:$0x1]
    %v296 = vlaneseq
    %v297 = vshrl.u32 %v296, 7
    %v298 = vsub.s32 0, %v297
    %v299 = vrot.slane %v294, %v298
    %v302 = vsel %vm42, %v292, 0
    %304 = vmatprep.subr.mxu0 0.0
    %305 = vmatpush1.msra.mxu0 0.0
    %306 = vmatprep.subr.mxu0 0.0
    %307 = vmatpush1.msra.mxu0 0.0
    %308 = vmatprep.subr.mxu0 0.0
    %309 = vmatpush1.msra.mxu0 0.0
    %310 = vmatprep.subr.mxu0 0.0
    %311 = vmatpush1.msra.mxu0 0.0
    %312 = vmatprep.subr.mxu0 0.0
    %313 = vmatpush1.msra.mxu0 0.0
    %314 = vmatprep.subr.mxu0 0.0
    %315 = vmatpush1.msra.mxu0 0.0
    %316 = vmatprep.subr.mxu0 0.0
    %317 = vmatpush1.msra.mxu0 0.0
    %318 = vmatprep.subr.mxu0 0.0
    %319 = vmatpush1.msra.mxu0 0.0
    %320 = vmatprep.subr.mxu0 0.0
    %321 = vmatpush1.msra.mxu0 0.0
    %322 = vmatprep.subr.mxu0 0.0
    %323 = vmatpush1.msra.mxu0 0.0
    %324 = vmatprep.subr.mxu0 0.0
    %325 = vmatpush1.msra.mxu0 0.0
    %326 = vmatprep.subr.mxu0 0.0
    %327 = vmatpush1.msra.mxu0 0.0
    %328 = vmatprep.subr.mxu0 0.0
    %329 = vmatpush1.msra.mxu0 0.0
    %330 = vmatprep.subr.mxu0 0.0
    %331 = vmatpush1.msra.mxu0 0.0
    %332 = vmatprep.subr.mxu0 0.0
    %333 = vmatpush1.msra.mxu0 0.0
    %334 = vmatprep.subr.mxu0 0.0
    %335 = vmatpush1.msra.mxu0 %v293
    %336 = vmatprep.subr.mxu0 0.0
    %337 = vmatpush2.msra.mxu0 0.0
    %338 = vmatprep.subr.mxu0 0.0
    %339 = vmatpush2.msra.mxu0 0.0
    %340 = vmatprep.subr.mxu0 0.0
    %341 = vmatpush2.msra.mxu0 0.0
    %342 = vmatprep.subr.mxu0 0.0
    %343 = vmatpush2.msra.mxu0 0.0
    %344 = vmatprep.subr.mxu0 0.0
    %345 = vmatpush2.msra.mxu0 0.0
    %346 = vmatprep.subr.mxu0 0.0
    %347 = vmatpush2.msra.mxu0 0.0
    %348 = vmatprep.subr.mxu0 0.0
    %349 = vmatpush2.msra.mxu0 0.0
    %350 = vmatprep.subr.mxu0 0.0
    %351 = vmatpush2.msra.mxu0 0.0
    %352 = vmatprep.subr.mxu0 0.0
    %353 = vmatpush2.msra.mxu0 0.0
    %354 = vmatprep.subr.mxu0 0.0
    %355 = vmatpush2.msra.mxu0 0.0
    %356 = vmatprep.subr.mxu0 0.0
    %357 = vmatpush2.msra.mxu0 0.0
    %358 = vmatprep.subr.mxu0 0.0
    %359 = vmatpush2.msra.mxu0 0.0
    %360 = vmatprep.subr.mxu0 0.0
    %361 = vmatpush2.msra.mxu0 0.0
    %362 = vmatprep.subr.mxu0 0.0
    %363 = vmatpush2.msra.mxu0 0.0
    %364 = vmatprep.subr.mxu0 0.0
    %365 = vmatpush2.msra.mxu0 0.0
    %366 = vmatprep.subr.mxu0 0.0
    %367 = vmatpush2.msra.mxu0 0.0
    %368 = vmatprep.mubr.f32.mxu0 0.0
    %369 = vmatmul.mubr.f32.gmra.mxu0 %v302
    %v370 = vpop.f32.mrf.mxu0
    %v371 = vadd.f32 %v299, %v370
    %v372 = vpop.f32.mrf.mxu0
    %373 = vdwg.mxu0
    %vm374 = vcmask 31744
    %375 = vst.msk [vmem:[#allocation2] sm:$0xff] %vm374, %v371
    // Predicated region
    $region38: #{dqn_forward.1} parent=1 // pred_check
      _
    $region39: #{dqn_forward.1} parent=1 // pred_check_branch
      %377 = sbr.rel (0) target = $region41
    $region40: #{dqn_forward.1} parent=1 // pred_region
      %s379 = ssub.s32 128, 32
      %380 = vsyncadd [#allocation3], %s379
      %s381 = sshll.u32 [#allocation2], 4
      %s382 = int_to_ptr.vmem [resolvable:$true] %s381
      %387 = dma.vmem_to_hbm [thread:$0]  %s382, 32, %s9, [#allocation3], 32, 32, 2
    $region41: #{dqn_forward.1} parent=1 // pred_fallthru
      _
    // Predicated region
    $region42: #{dqn_forward.1} parent=1 // pred_check
      _
    $region43: #{dqn_forward.1} parent=1 // pred_check_branch
      %389 = sbr.rel (0) target = $region45
    $region44: #{dqn_forward.1} parent=1 // pred_region
      %390 = dma.done [#allocation3], 128
    $region45: #{dqn_forward.1} parent=1 // pred_fallthru
      _
    %391 = vsyncpa [#allocation3], 1

</llo_original>
